<compile_context>
chip_gen: v5e
topology: v5e:2x2
jax: 0.10.0
libtpu: 0.0.40
codegen_flags: <defaults>
</compile_context>

<pallas_src>
import functools
import math

import jax
import jax.numpy as jnp
from jax import lax
from jax.experimental import pallas as pl
from jax.experimental.pallas import tpu as pltpu


# ---------------------------------------------------------------------------
# Kernel 1: fused, lane-dense QKV projection.  grid = (B, num_t_tiles)
# ---------------------------------------------------------------------------
def _qkv_proj_kernel(x_ref, w_ref, qkv_ref):
    # x_ref : (1, bt, C) fp32   w_ref : (C, 3*H*D) bf16   qkv_ref : (1, bt, 3*H*D) bf16
    x = x_ref[0].astype(jnp.bfloat16)                      # bf16 MXU operand
    qkv_ref[0] = jnp.dot(x, w_ref[...],
                         preferred_element_type=jnp.float32).astype(qkv_ref.dtype)


def _qkv_projection(x, w_qkv, *, block_t):
    B, T, C = x.shape
    three_hd = w_qkv.shape[1]
    nt = T // block_t
    return pl.pallas_call(
        _qkv_proj_kernel,
        out_shape=jax.ShapeDtypeStruct((B, T, three_hd), jnp.bfloat16),
        grid_spec=pltpu.PrefetchScalarGridSpec(
            num_scalar_prefetch=0,
            grid=(B, nt),
            in_specs=[
                pl.BlockSpec((1, block_t, C), lambda b, t: (b, t, 0)),
                pl.BlockSpec((C, three_hd), lambda b, t: (0, 0)),
            ],
            out_specs=pl.BlockSpec((1, block_t, three_hd), lambda b, t: (b, t, 0)),
        ),
        compiler_params=pltpu.CompilerParams(
            dimension_semantics=("parallel", "parallel")),
    )(x, w_qkv)


# ---------------------------------------------------------------------------
# Kernel 2: flash attention + fused output projection.
# grid = (B, num_q_tiles, H, num_kv_tiles); H and KV are reduction axes.
# ---------------------------------------------------------------------------
def _flash_attn_kernel(q_ref, k_ref, v_ref, wo_ref, o_ref,
                       m_sc, l_sc, acc_sc, y_sc, *,
                       causal: bool, block_q: int, block_kv: int, scale: float):
    qi = pl.program_id(1)
    h = pl.program_id(2)
    ki = pl.program_id(3)
    nh = pl.num_programs(2)
    nk = pl.num_programs(3)

    # Zero the output-projection accumulator once per (batch, q-tile).
    @pl.when(jnp.logical_and(h == 0, ki == 0))
    def _():
        y_sc[...] = jnp.zeros_like(y_sc)

    # Reset the online-softmax state at the start of each head's KV sweep.
    @pl.when(ki == 0)
    def _():
        m_sc[...] = jnp.full_like(m_sc, -jnp.inf)
        l_sc[...] = jnp.zeros_like(l_sc)
        acc_sc[...] = jnp.zeros_like(acc_sc)

    def _accumulate_tile():
        q = q_ref[0, 0]                                    # (tq, D) bf16
        k = k_ref[0, 0]                                    # (tk, D) bf16
        v = v_ref[0, 0]                                    # (tk, D) bf16
        # S = Q K^T * scale (bf16 MXU inputs, fp32 accumulate).
        s = lax.dot_general(q, k, (((1,), (1,)), ((), ())),
                            preferred_element_type=jnp.float32) * scale
        if causal:
            # One iota pair per tile.  A large negative (not -inf) keeps exp()
            # at exact 0 without NaN risk; no causal query row is ever fully
            # masked (the diagonal is in its first KV tile).
            row = qi * block_q + lax.broadcasted_iota(
                jnp.int32, (block_q, block_kv), 0)
            col = ki * block_kv + lax.broadcasted_iota(
                jnp.int32, (block_q, block_kv), 1)
            s = jnp.where(col <= row, s, jnp.float32(-1e30))
        m_prev = m_sc[...]
        m_new = jnp.maximum(m_prev, jnp.max(s, axis=-1, keepdims=True))
        alpha = jnp.exp(m_prev - m_new)                    # fp32 softmax math
        p = jnp.exp(s - m_new)
        l_sc[...] = alpha * l_sc[...] + jnp.sum(p, axis=-1, keepdims=True)
        acc_sc[...] = alpha * acc_sc[...] + jnp.dot(
            p.astype(v.dtype), v, preferred_element_type=jnp.float32)
        m_sc[...] = m_new

    if causal:
        # Skip compute for KV tiles entirely above the diagonal (their DMA is
        # also skipped by the clamped index_map in the wrapper).
        pl.when(ki * block_kv <= qi * block_q + (block_q - 1))(_accumulate_tile)
    else:
        _accumulate_tile()

    # Finalize this head: normalize and fold directly into the out-projection
    # accumulator -- the per-head attention output never touches HBM.
    # (approx=True reciprocal is a cheap EUP option once numerics are signed off.)
    @pl.when(ki == nk - 1)
    def _():
        attn = acc_sc[...] * pl.reciprocal(l_sc[...], approx=False)   # (tq, D)
        y_sc[...] += jnp.dot(attn.astype(wo_ref.dtype), wo_ref[0],
                             preferred_element_type=jnp.float32)

    # Write the (tq, C) output tile once, after the last head.
    @pl.when(jnp.logical_and(h == nh - 1, ki == nk - 1))
    def _():
        o_ref[0] = y_sc[...].astype(o_ref.dtype)


def attention_forward(x, wqkv, wout, *, num_heads: int, head_dim: int,
                      causal: bool = False, block_q: int | None = None,
                      block_kv: int | None = None):
    """x: (B, T, C) fp32.  wqkv: (3*H*D, C), wout: (C, H*D) (PyTorch Linear layout)."""
    B, T, C = x.shape
    HD = num_heads * head_dim
    assert wqkv.shape == (3 * HD, C)
    assert wout.shape == (C, HD)

    if block_q is None:
        block_q = min(T, 256)
    if block_kv is None:
        block_kv = min(T, 128)
    assert T % block_q == 0 and T % block_kv == 0

    # --- layout plumbing (wrapper-side, outside the kernels) ----------------
    # Linear computes x @ W^T; lay the QKV weight out as one (C, 3*H*D) bf16
    # slab for a single lane-dense matmul per (b, t) tile.
    w_qkv = wqkv.T.astype(jnp.bfloat16)                            # (C, 3*H*D)
    # out_proj weight (C, H*D) -> per-head (D, C) bf16 slabs.
    wo = wout.T.reshape(num_heads, head_dim, C).astype(jnp.bfloat16)

    qkv = _qkv_projection(x, w_qkv, block_t=block_q)               # (B, T, 3HD) bf16

    # Head split as cheap XLA layout plumbing (robust for head_dim < 128).
    # TODO(synk): for head_dim a multiple of 128 this split can instead be done
    # by the attention kernel's BlockSpec index_map, avoiding this round trip.
    q, k, v = jnp.split(qkv, 3, axis=-1)

    def heads(t):
        return t.reshape(B, T, num_heads, head_dim).transpose(0, 2, 1, 3)

    q, k, v = heads(q), heads(k), heads(v)                         # (B, H, T, D) bf16

    nq = T // block_q
    nk = T // block_kv

    # Causal: clamp the K/V block index so above-diagonal steps re-request the
    # last needed tile (pipeline skips the DMA); pairs with the pl.when skip.
    def _last_kv_block(qi):
        return (qi * block_q + block_q - 1) // block_kv

    if causal:
        kv_index = lambda b, qi, h, ki: (b, h, jnp.minimum(ki, _last_kv_block(qi)), 0)
    else:
        kv_index = lambda b, qi, h, ki: (b, h, ki, 0)

    kernel = functools.partial(
        _flash_attn_kernel, causal=causal, block_q=block_q,
        block_kv=block_kv, scale=1.0 / math.sqrt(head_dim))

    return pl.pallas_call(
        kernel,
        out_shape=jax.ShapeDtypeStruct((B, T, C), x.dtype),
        grid_spec=pltpu.PrefetchScalarGridSpec(
            num_scalar_prefetch=0,
            grid=(B, nq, num_heads, nk),
            in_specs=[
                pl.BlockSpec((1, 1, block_q, head_dim),
                             lambda b, qi, h, ki: (b, h, qi, 0)),
                pl.BlockSpec((1, 1, block_kv, head_dim), kv_index),
                pl.BlockSpec((1, 1, block_kv, head_dim), kv_index),
                pl.BlockSpec((1, head_dim, C),
                             lambda b, qi, h, ki: (h, 0, 0)),
            ],
            out_specs=pl.BlockSpec((1, block_q, C),
                                   lambda b, qi, h, ki: (b, qi, 0)),
            scratch_shapes=[
                pltpu.VMEM((block_q, 1), jnp.float32),          # running max
                pltpu.VMEM((block_q, 1), jnp.float32),          # running sum
                pltpu.VMEM((block_q, head_dim), jnp.float32),   # attn accumulator
                pltpu.VMEM((block_q, C), jnp.float32),          # out-proj accumulator
            ],
        ),
        compiler_params=pltpu.CompilerParams(
            dimension_semantics=("parallel", "parallel", "arbitrary", "arbitrary")),
    )(q, k, v, wo)


# ---------------------------------------------------------------------------
# Pure-JAX fp32 reference mirroring the PyTorch module (eval mode, dropout=0).
# ---------------------------------------------------------------------------
def _reference(x, wqkv, wout, *, num_heads, head_dim, causal):
    B, T, C = x.shape
    qkv = x @ wqkv.T
    q, k, v = jnp.split(qkv, 3, axis=-1)

    def heads(t):
        return t.reshape(B, T, num_heads, head_dim).transpose(0, 2, 1, 3)

    q, k, v = heads(q), heads(k), heads(v)
    s = jnp.einsum("bhtd,bhsd->bhts", q, k) / math.sqrt(head_dim)
    if causal:
        mask = jnp.tril(jnp.ones((T, T), bool))
        s = jnp.where(mask[None, None], s, -jnp.inf)
    a = jax.nn.softmax(s, axis=-1)
    o = jnp.einsum("bhts,bhsd->bhtd", a, v)
    o = o.transpose(0, 2, 1, 3).reshape(B, T, num_heads * head_dim)
    return o @ wout.T


if __name__ == "__main__":
    hidden_size = 32
    num_heads = 4
    head_dim = 8

    key = jax.random.PRNGKey(0)
    kq, ko, kx1, kx2 = jax.random.split(key, 4)
    wqkv = jax.random.normal(
        kq, (3 * num_heads * head_dim, hidden_size), jnp.float32
    ) * (1.0 / math.sqrt(hidden_size))
    wout = jax.random.normal(
        ko, (hidden_size, num_heads * head_dim), jnp.float32
    ) * (1.0 / math.sqrt(num_heads * head_dim))

    ok = True
    # Two configs: single KV tile (T=16) and multi-KV-tile (T=32, 16-wide tiles)
    # to exercise online-softmax accumulation and causal tile skipping.  Tiles
    # are multiples of 16 to match bf16 sublane packing.
    for (B, T, blk), kk in (((2, 16, 16), kx1), ((2, 32, 16), kx2)):
        x = jax.random.normal(kk, (B, T, hidden_size), jnp.float32)
        for causal in (False, True):
            out = attention_forward(x, wqkv, wout, num_heads=num_heads,
                                    head_dim=head_dim, causal=causal,
                                    block_q=blk, block_kv=blk)
            out = jax.block_until_ready(out)
            ref = _reference(x, wqkv, wout, num_heads=num_heads,
                             head_dim=head_dim, causal=causal)
            # Tolerance covers bf16 rounding of the MXU operands (q/k/v/p/attn
            # and weights); softmax math and accumulation stay fp32.
            if not jnp.allclose(out, ref, atol=3e-2, rtol=3e-2):
                ok = False

    if ok:
        print("KERNEL_OK")
</pallas_src>

<mosaic_0001>
module attributes {stable_mosaic.version = 11 : i64} {
  func.func @_qkv_proj_kernel(%arg0: i32, %arg1: i32, %arg2: memref<1x16x32xf32, #tpu.memory_space<vmem>>, %arg3: memref<32x96xbf16, #tpu.memory_space<vmem>>, %arg4: memref<1x16x96xbf16, #tpu.memory_space<vmem>>) attributes {dimension_semantics = [#tpu.dimension_semantics<parallel>, #tpu.dimension_semantics<parallel>], iteration_bounds = array<i64: 2, 1>, scalar_prefetch = 0 : i64, scratch_operands = 0 : i64, tpu.core_type = #tpu.core_type<tc>, window_params = [{transform_indices = @transform_0, window_bounds = array<i64: 1, 16, 32>}, {pipeline_mode = #tpu.pipeline_mode<synchronous>, transform_indices = @transform_1, window_bounds = array<i64: 32, 96>}, {transform_indices = @transform_2, window_bounds = array<i64: 1, 16, 96>}]} {
    %c0 = arith.constant 0 : index
    %c0_0 = arith.constant 0 : index
    %c0_1 = arith.constant 0 : index
    %0 = vector.load %arg2[%c0, %c0_0, %c0_1] : memref<1x16x32xf32, #tpu.memory_space<vmem>>, vector<1x16x32xf32>
    %1 = vector.shape_cast %0 : vector<1x16x32xf32> to vector<16x32xf32>
    %2 = arith.truncf %1 : vector<16x32xf32> to vector<16x32xbf16>
    %c0_2 = arith.constant 0 : index
    %c0_3 = arith.constant 0 : index
    %3 = vector.load %arg3[%c0_2, %c0_3] : memref<32x96xbf16, #tpu.memory_space<vmem>>, vector<32x96xbf16>
    %cst = arith.constant dense<0.000000e+00> : vector<16x96xf32>
    %4 = tpu.matmul %2, %3, %cst {dimension_numbers = #tpu.dot_dimension_numbers<[1], [0], [0], [1], [0, 0, 1, 1], [], []>} : vector<16x32xbf16>, vector<32x96xbf16>, vector<16x96xf32> -> vector<16x96xf32>
    %5 = arith.truncf %4 : vector<16x96xf32> to vector<16x96xbf16>
    %c0_4 = arith.constant 0 : index
    %c0_5 = arith.constant 0 : index
    %c0_6 = arith.constant 0 : index
    %6 = vector.load %arg4[%c0_4, %c0_5, %c0_6] : memref<1x16x96xbf16, #tpu.memory_space<vmem>>, vector<1x16x96xbf16>
    %7 = vector.shape_cast %6 : vector<1x16x96xbf16> to vector<16x96xbf16>
    %8 = vector.shape_cast %5 : vector<16x96xbf16> to vector<1x16x96xbf16>
    tpu.vector_store %arg4[%c0_4, %c0_5, %c0_6], %8 {strides = array<i32>} : memref<1x16x96xbf16, #tpu.memory_space<vmem>>, vector<1x16x96xbf16>,
    return
  }
  func.func @transform_0(%arg0: i32, %arg1: i32) -> (i32, i32, i32) {
    %c0_i32 = arith.constant 0 : i32
    %c0_i32_0 = arith.constant 0 : i32
    return %arg0, %arg1, %c0_i32 : i32, i32, i32
  }
  func.func @transform_1(%arg0: i32, %arg1: i32) -> (i32, i32) {
    %c0_i32 = arith.constant 0 : i32
    %c0_i32_0 = arith.constant 0 : i32
    %c0_i32_1 = arith.constant 0 : i32
    return %c0_i32, %c0_i32_0 : i32, i32
  }
  func.func @transform_2(%arg0: i32, %arg1: i32) -> (i32, i32, i32) {
    %c0_i32 = arith.constant 0 : i32
    %c0_i32_0 = arith.constant 0 : i32
    return %arg0, %arg1, %c0_i32 : i32, i32, i32
  }
}

</mosaic_0001>

<llo_original>
// kernel: tpu_custom_call.1
$region0: #{tpu_custom_call.1}
  #allocation0 [shape = 'u32[]', space=smem, size = 0x4, offset = 0x4, fixed_abs, tag = 'smem constant byte address 0x4 - core index']
  #allocation1 [shape = 'u32[72,128]{1,0:T(1,128)}', space=vmem, size = 0x9000, scoped, tag = 'internal scratch']
  %s0 = inlined_call_operand.hbm [shape: f32[2,16,32], index: 0, kind: input, shape index: {}]
  %s1 = inlined_call_operand.hbm [shape: bf16[32,96], index: 1, kind: input, shape index: {}]
  %s2 = inlined_call_operand.hbm [shape: bf16[2,16,96], index: 2, kind: output, shape index: {}]
  %s3 = sld [smem:[#allocation0]]
  $region49: #{tpu_custom_call.1} parent=0
    _
  %s5 = ssub.s32 1, %s3
  %s6 = scalar_select 0, %s5, %s3
  $region1: #{tpu_custom_call.1} parent=0
    #allocation2 [shape = 'u8[16384]{0}', space=vmem, size = 0x4000, scoped, tag = 'input window, operand 0']
    #allocation3 [shape = 's32[2]{0}', space=sflag, size = 0x8, scoped, tag = 'scoped memory for tpu_custom_call.1']
    #allocation4 [shape = 's32[2]{0}', space=sflag, size = 0x8, scoped, tag = 'scoped memory for tpu_custom_call.1']
    #allocation5 [shape = 'u8[8192]{0}', space=vmem, size = 0x2000, scoped, tag = 'input window, operand 1, single buffered']
    #allocation6 [shape = 's32[1]{0}', space=sflag, size = 0x4, scoped, tag = 'scoped memory for tpu_custom_call.1']
    #allocation7 [shape = 'u8[8192]{0}', space=vmem, size = 0x2000, scoped, tag = 'output window, operand 0']
    %7 = vsyncpa [#allocation3], 0
    %s8 = scalar_lea.sflag [#allocation3], 1
    %9 = vsyncpa %s8, 0
    %10 = vsyncpa [#allocation6], 0
    %11 = vsyncpa [#allocation4], 0
    %s12 = scalar_lea.sflag [#allocation4], 1
    %13 = vsyncpa %s12, 0
    loop: start=0, step=1, limit=4
    $region2: #{tpu_custom_call.1} parent=1 // loop_pre_header
      _
    $region3: #{tpu_custom_call.1} parent=1 // loop_header
      %s15 = sphi 0, %s19
      %p16 = scmp.ge.s32.totalorder %s15, 4
      %s22 = sphi 0, %s34
      %s23 = sphi 0, %s30
      %s24 = sphi 0, %s22
      %s25 = sphi 0, %s23
      %s26 = sphi 0, %s24
      %s27 = sphi 0, %s25
      %s39 = sphi 0, %s41
      %s42 = sphi 0, %s39
      %s43 = sphi 0, %s42
      %s59 = sphi 0, %s43
      %s63 = sphi 0, %s63
      %s65 = sphi 0, %s63
      %s66 = sphi 0, %s65
      %s80 = sphi 0, %s66
      %s88 = sphi 0, %s90
      %s91 = sphi 0, %s88
      %s92 = sphi 0, %s91
      %s108 = sphi 0, %s92
    $region4: #{tpu_custom_call.1} parent=1 // loop_header_branch
      %18 = sbr.rel (%p16) target = $region8
    $region5: #{tpu_custom_call.1} parent=1 // loop_body
      %s20 = ssub.s32 %s15, 1
      %s21 = ssub.s32 %s15, 2
      %s28 = sadd.s32 1, %s23
      %p29 = scmp.ge.s32.totalorder %s28, 1
      %s30 = scalar_select %p29, 0, %s28
      %s31 = sadd.s32 1, %s22
      %s32 = scalar_select %p29, %s31, %s22
      %p33 = scmp.ge.s32.totalorder %s32, 2
      %s34 = scalar_select %p33, 0, %s32
      %s35 = ssub.s32 %s22, %s34
      %s36 = ssub.s32 %s23, %s30
      %s37 = sor.u32 %s35, %s36
      %p38 = scmp.eq.s32.totalorder %s37, 0
      %s40 = sadd.s32 %s39, 1
      %s41 = scalar_select %p38, %s39, %s40
      %p44 = pneg %p38
      %p45 = scmp.eq.s32.totalorder %s15, 1
      %p46 = por %p44, %p45
      %p47 = scmp.ne.s32.totalorder %s39, %s42
      %p48 = scmp.eq.s32.totalorder %s15, 0
      %p49 = por %p47, %p48
      %p50 = scmp.ne.s32.totalorder %s39, %s42
      %p51 = scmp.eq.s32.totalorder %s20, 1
      %p52 = por %p50, %p51
      %p53 = scmp.ne.s32.totalorder %s42, %s43
      %p54 = scmp.eq.s32.totalorder %s20, 0
      %p55 = por %p53, %p54
      %p56 = scmp.ne.s32.totalorder %s42, %s43
      %p57 = scmp.eq.s32.totalorder %s21, 1
      %p58 = por %p56, %p57
      %p60 = scmp.ne.s32.totalorder %s43, %s59
      %p61 = scmp.eq.s32.totalorder %s21, 0
      %p62 = por %p60, %p61
      %s64 = sadd.s32 %s63, 1
      %p67 = scmp.eq.s32.totalorder %s15, 1
      %p68 = scmp.ne.s32.totalorder %s63, %s65
      %p69 = scmp.eq.s32.totalorder %s15, 0
      %p70 = por %p68, %p69
      %p71 = scmp.ne.s32.totalorder %s63, %s65
      %p72 = scmp.eq.s32.totalorder %s20, 1
      %p73 = por %p71, %p72
      %p74 = scmp.ne.s32.totalorder %s65, %s66
      %p75 = scmp.eq.s32.totalorder %s20, 0
      %p76 = por %p74, %p75
      %p77 = scmp.ne.s32.totalorder %s65, %s66
      %p78 = scmp.eq.s32.totalorder %s21, 1
      %p79 = por %p77, %p78
      %p81 = scmp.ne.s32.totalorder %s66, %s80
      %p82 = scmp.eq.s32.totalorder %s21, 0
      %p83 = por %p81, %p82
      %s84 = ssub.s32 %s22, %s34
      %s85 = ssub.s32 %s23, %s30
      %s86 = sor.u32 %s84, %s85
      %p87 = scmp.eq.s32.totalorder %s86, 0
      %s89 = sadd.s32 %s88, 1
      %s90 = scalar_select %p87, %s88, %s89
      %p93 = pneg %p87
      %p94 = scmp.eq.s32.totalorder %s15, 1
      %p95 = por %p93, %p94
      %p96 = scmp.ne.s32.totalorder %s88, %s91
      %p97 = scmp.eq.s32.totalorder %s15, 0
      %p98 = por %p96, %p97
      %p99 = scmp.ne.s32.totalorder %s88, %s91
      %p100 = scmp.eq.s32.totalorder %s20, 1
      %p101 = por %p99, %p100
      %p102 = scmp.ne.s32.totalorder %s91, %s92
      %p103 = scmp.eq.s32.totalorder %s20, 0
      %p104 = por %p102, %p103
      %p105 = scmp.ne.s32.totalorder %s91, %s92
      %p106 = scmp.eq.s32.totalorder %s21, 1
      %p107 = por %p105, %p106
      %p109 = scmp.ne.s32.totalorder %s92, %s108
      %p110 = scmp.eq.s32.totalorder %s21, 0
      %p111 = por %p109, %p110
      %p112 = scmp.le.s32.totalorder 1, %s15
      %p113 = scmp.lt.s32.totalorder %s15, 3
      %p114 = pnand %p112, %p113
      %p115 = pneg %p114
      // Predicated region
      $region9: #{tpu_custom_call.1} parent=5 // pred_check
        _
      $region10: #{tpu_custom_call.1} parent=5 // pred_check_branch
        %117 = sbr.rel (%p114) target = $region12
      $region11: #{tpu_custom_call.1} parent=5 // pred_region
        %s118 = ssub.s32 %s15, 1
        // Predicated region
        $region13: #{tpu_custom_call.1} parent=11 // pred_check
          %p119 = pneg %p76
        $region14: #{tpu_custom_call.1} parent=11 // pred_check_branch
          %121 = sbr.rel (%p119) target = $region16
        $region15: #{tpu_custom_call.1} parent=11 // pred_region
          %123 = vsyncadd [#allocation6], 0
          %s124 = sshll.u32 %s1, 4
          %s125 = int_to_ptr.hbm [resolvable:$true] %s124
          %s126 = sshll.u32 [#allocation5], 4
          %s127 = int_to_ptr.vmem [resolvable:$true] %s126
          %132 = dma.hbm_to_vmem [thread:$0]  %s125, 256, %s127, [#allocation6], 64, 64, 4
        $region16: #{tpu_custom_call.1} parent=11 // pred_fallthru
          _
      $region12: #{tpu_custom_call.1} parent=5 // pred_fallthru
        _
      %p133 = scmp.lt.s32.totalorder %s15, 2
      // Predicated region
      $region17: #{tpu_custom_call.1} parent=5 // pred_check
        %p134 = pneg %p133
      $region18: #{tpu_custom_call.1} parent=5 // pred_check_branch
        %136 = sbr.rel (%p134) target = $region20
      $region19: #{tpu_custom_call.1} parent=5 // pred_region
        // Predicated region
        $region21: #{tpu_custom_call.1} parent=19 // pred_check
          %p137 = pneg %p49
        $region22: #{tpu_custom_call.1} parent=19 // pred_check_branch
          %139 = sbr.rel (%p137) target = $region24
        $region23: #{tpu_custom_call.1} parent=19 // pred_region
          %s140 = sand.u32 %s39, 1
          %s141 = scalar_lea.sflag [#allocation3], %s140
          %s142 = sand.u32 %s39, 1
          %s143 = smul.addr %s142, 16
          %s144 = scalar_lea.vmem [#allocation2], %s143
          %s145 = smul.u32 2, %s23
          %147 = vsyncadd %s141, 0
          %s148 = smul.addr %s22, 2
          %s149 = sadd.s32 %s145, %s148
          %s150 = smul.addr %s149, 8
          %s151 = scalar_lea.hbm %s0, %s150
          %s152 = sshll.u32 %s151, 4
          %s153 = int_to_ptr.hbm [resolvable:$true] %s152
          %s154 = sshll.u32 %s144, 4
          %s155 = int_to_ptr.vmem [resolvable:$true] %s154
          %160 = dma.hbm_to_vmem [thread:$0]  %s153, 256, %s155, %s141, 128, 128, 8
        $region24: #{tpu_custom_call.1} parent=19 // pred_fallthru
          _
      $region20: #{tpu_custom_call.1} parent=5 // pred_fallthru
        _
      %p161 = scmp.le.s32.totalorder 1, %s15
      %p162 = scmp.lt.s32.totalorder %s15, 3
      %p163 = pnand %p161, %p162
      %p164 = pneg %p163
      // Predicated region
      $region25: #{tpu_custom_call.1} parent=5 // pred_check
        _
      $region26: #{tpu_custom_call.1} parent=5 // pred_check_branch
        %166 = sbr.rel (%p163) target = $region28
      $region27: #{tpu_custom_call.1} parent=5 // pred_region
        %s167 = ssub.s32 %s15, 1
        %s168 = sand.u32 %s42, 1
        %s169 = scalar_lea.sflag [#allocation3], %s168
        %s170 = sand.u32 %s42, 1
        %s171 = smul.addr %s170, 16
        %s172 = scalar_lea.vmem [#allocation2], %s171
        // Predicated region
        $region29: #{tpu_custom_call.1} parent=27 // pred_check
          %p173 = pneg %p55
        $region30: #{tpu_custom_call.1} parent=27 // pred_check_branch
          %175 = sbr.rel (%p173) target = $region32
        $region31: #{tpu_custom_call.1} parent=27 // pred_region
          %177 = dma.done %s169, 256
        $region32: #{tpu_custom_call.1} parent=27 // pred_fallthru
          _
        // Predicated region
        $region33: #{tpu_custom_call.1} parent=27 // pred_check
          %p178 = pneg %p76
        $region34: #{tpu_custom_call.1} parent=27 // pred_check_branch
          %180 = sbr.rel (%p178) target = $region36
        $region35: #{tpu_custom_call.1} parent=27 // pred_region
          %182 = dma.done [#allocation6], 256
        $region36: #{tpu_custom_call.1} parent=27 // pred_fallthru
          _
        %s183 = sand.u32 %s42, 1
        %s184 = scalar_lea.sflag [#allocation3], %s183
        %s185 = sand.u32 %s42, 1
        %s186 = smul.addr %s185, 16
        %s187 = scalar_lea.vmem [#allocation2], %s186
        %p188 = pneg %p55
        %p189 = pneg %p52
        %p190 = pneg %p76
        %p191 = pneg %p73
        %p192 = pneg %p104
        %p193 = pneg %p101
        %s194 = sand.u32 %s91, 1
        %s195 = scalar_lea.sflag [#allocation4], %s194
        %s196 = sand.u32 %s91, 1
        %s197 = smul.addr %s196, 8
        %s198 = scalar_lea.vmem [#allocation7], %s197
        %s199 = smul.u32 2, %s25
        %s200 = smul.u32 2, %s25
        %v202 = vld [vmem:[%s172] sm:$0xff]
        %v203 = vld [vmem:[%s172 + $0x8] sm:$0xff]
        %v204 = vpack.c.bf16 %v203, %v202
        %v205 = vld [vmem:[#allocation5] sm:$0xf]
        %v206 = vld [vmem:[#allocation5 + $0x4] sm:$0xf]
        %v207 = vld [vmem:[#allocation5 + $0x8] sm:$0xf]
        %v208 = vld [vmem:[#allocation5 + $0xc] sm:$0xf]
        %v213 = vunpack.c.l.b16 %v205
        %v214 = vunpack.c.l.b16 %v206
        %v215 = vunpack.c.l.b16 %v207
        %v216 = vunpack.c.l.b16 %v208
        %v217 = vpack.c.b16 %v214, %v213
        %v218 = vpack.c.b16 %v216, %v215
        %vm221 = vcmask 261120
        %v223 = vsel %vm221, %v204, 0
        %225 = vmatpush.bf16.msra.mxu0 0
        %226 = vmatpush.bf16.msra.mxu0 0
        %227 = vmatpush.bf16.msra.mxu0 0
        %228 = vmatpush.bf16.msra.mxu0 0
        %229 = vmatpush.bf16.msra.mxu0 0
        %230 = vmatpush.bf16.msra.mxu0 0
        %231 = vmatpush.bf16.msra.mxu0 %v218
        %232 = vmatpush.bf16.msra.mxu0 %v217
        %233 = vmatmul.bf16.gmra.mxu0 %v223
        %v234 = vpop.f32.mrf.mxu0
        %v235 = vadd.f32 0.0, %v234
        %v236 = vpop.f32.mrf.mxu0
        %v237 = vadd.f32 0.0, %v236
        %238 = vdwg.mxu0
        %v239 = vpack.c.bf16 %v235, %v235
        %v240 = vpack.c.bf16 %v237, %v237
        %vm241 = vcmask 781312
        %242 = vst.msk [vmem:[%s198] sm:$0xf] %vm241, %v239
        %243 = vst.msk [vmem:[%s198 + $0x4] sm:$0xf] %vm241, %v240
        %s244 = sand.u32 %s91, 1
        %s245 = scalar_lea.sflag [#allocation4], %s244
        %s246 = sand.u32 %s91, 1
        %s247 = smul.addr %s246, 8
        %s248 = scalar_lea.vmem [#allocation7], %s247
        // Predicated region
        $region37: #{tpu_custom_call.1} parent=27 // pred_check
          %p249 = pneg %p101
        $region38: #{tpu_custom_call.1} parent=27 // pred_check_branch
          %251 = sbr.rel (%p249) target = $region40
        $region39: #{tpu_custom_call.1} parent=27 // pred_region
          %s252 = smul.u32 2, %s25
          %254 = vsyncadd %s245, 0
          %s255 = smul.addr %s24, 2
          %s256 = sadd.s32 %s252, %s255
          %s257 = smul.addr %s256, 4
          %s258 = scalar_lea.hbm %s2, %s257
          %s259 = sshll.u32 %s248, 4
          %s260 = int_to_ptr.vmem [resolvable:$true] %s259
          %s261 = sshll.u32 %s258, 4
          %s262 = int_to_ptr.hbm [resolvable:$true] %s261
          %267 = dma.vmem_to_hbm [thread:$0]  %s260, 128, %s262, %s245, 64, 64, 4
        $region40: #{tpu_custom_call.1} parent=27 // pred_fallthru
          _
      $region28: #{tpu_custom_call.1} parent=5 // pred_fallthru
        _
      %p268 = scmp.le.s32.totalorder 2, %s15
      // Predicated region
      $region41: #{tpu_custom_call.1} parent=5 // pred_check
        %p269 = pneg %p268
      $region42: #{tpu_custom_call.1} parent=5 // pred_check_branch
        %271 = sbr.rel (%p269) target = $region44
      $region43: #{tpu_custom_call.1} parent=5 // pred_region
        %s272 = ssub.s32 %s15, 2
        // Predicated region
        $region45: #{tpu_custom_call.1} parent=43 // pred_check
          %p273 = pneg %p107
        $region46: #{tpu_custom_call.1} parent=43 // pred_check_branch
          %275 = sbr.rel (%p273) target = $region48
        $region47: #{tpu_custom_call.1} parent=43 // pred_region
          %s276 = sand.u32 %s92, 1
          %s277 = scalar_lea.sflag [#allocation4], %s276
          %s278 = sand.u32 %s92, 1
          %s279 = smul.addr %s278, 8
          %s280 = scalar_lea.vmem [#allocation7], %s279
          %282 = dma.done %s277, 128
        $region48: #{tpu_custom_call.1} parent=43 // pred_fallthru
          _
      $region44: #{tpu_custom_call.1} parent=5 // pred_fallthru
        _
    $region6: #{tpu_custom_call.1} parent=1 // loop_footer
      %s19 = sadd.s32 1, %s15
    $region7: #{tpu_custom_call.1} parent=1 // loop_footer_branch
      %14 = sbr.rel target = $region3
    $region8: #{tpu_custom_call.1} parent=1 // loop_exit
      _
    %283 = vsyncpa [#allocation3], 1
    %s284 = scalar_lea.sflag [#allocation3], 1
    %285 = vsyncpa %s284, 1
    %286 = vsyncpa [#allocation6], 1
    %287 = vsyncpa [#allocation4], 1
    %s288 = scalar_lea.sflag [#allocation4], 1
    %289 = vsyncpa %s288, 1

</llo_original>
